<compile_context>
chip_gen: v7x
topology: tpu7x:2x2x1
jax: 0.10.0
libtpu: 0.0.40
codegen_flags: <defaults>
</compile_context>

<pallas_src>
import functools

import jax
import jax.numpy as jnp
from jax.experimental import pallas as pl
from jax.experimental.pallas import tpu as pltpu

_LANE = 128
_SUBLANE = 8


def _round_up(x, m):
    return ((x + m - 1) // m) * m


def _fused_tcn_kernel(x_ref, w_ref, b_ref, o_ref, buf_a, buf_b, *,
                      levels, K, C_in, L0, L_final, NB, S, PF, compute_dtype):
    """Fused multi-level conv1d(+pad)+bias+ReLU chain for one batch tile.

    x_ref : (NB, L0, C_in)            unpadded input tile
    w_ref : (levels, K*C_pad, C_pad)  per-level flattened (tap-major) weights
    b_ref : (levels, 1, C_pad)        per-level biases (zero in padded lanes)
    o_ref : (NB, L_final, C_pad)      final activation (lane-dense, padded C)
    buf_a, buf_b : (PF + NB*S, C_pad) f32 VMEM ping-pong slabs; batch b of the
        current level's activation lives at rows [b*S+PF, b*S+PF+L_i), all
        other rows are zero (this supplies the conv zero padding for free).
    """
    p = K - 1
    M = NB * S

    # buf_a needs a full zero-init each grid step: its gap rows / padded
    # channels are read as conv zero-padding, and with >=3 levels it is reused
    # as a ping-pong target.  buf_b only needs its front margin zeroed — its
    # [PF, PF+M) compute region is always fully (re)written (with gap rows
    # masked to zero) before any level reads it.
    buf_a[...] = jnp.zeros_like(buf_a)
    buf_b[0:PF, :] = jnp.zeros((PF, buf_b.shape[1]), jnp.float32)

    # Scatter the input tile into the packed layout (channels >= C_in stay 0).
    for b in range(NB):
        r0 = b * S + PF
        buf_a[r0:r0 + L0, 0:C_in] = x_ref[b].astype(jnp.float32)

    # Hoisted once: local position of each packed row within its sequence.
    if levels > 1:
        row_mod = jax.lax.broadcasted_iota(jnp.int32, (M, 1), 0) % S

    cur, nxt = buf_a, buf_b
    L_i = L0
    for lvl in range(levels):
        L_next = L_i + p

        # im2col: K shifted lane-dense (M, C_pad) slices concatenated along
        # lanes -> single (M, K*C_pad) @ (K*C_pad, C_pad) MXU contraction.
        taps = [cur[PF - p + k: PF - p + k + M, :] for k in range(K)]
        x_im2col = jnp.concatenate(taps, axis=-1) if K > 1 else taps[0]

        h = jnp.dot(x_im2col.astype(compute_dtype),
                    w_ref[lvl].astype(compute_dtype),
                    preferred_element_type=jnp.float32)
        h = jnp.maximum(h + b_ref[lvl].astype(jnp.float32), 0.0)
        # TODO(synk): nn.Dropout(0.2) is treated as identity (eval/inference
        # semantics); training-mode random masking is not reproduced.

        if lvl + 1 < levels:
            # Keep padding / inter-sequence gap rows at exactly zero so the
            # next level's taps read clean zero padding.
            h = jnp.where(row_mod < L_next, h, 0.0)
            nxt[PF:PF + M, :] = h          # aligned full-width store
            cur, nxt = nxt, cur
        else:
            # Last level: extract each batch element's rows straight to o_ref.
            for b in range(NB):
                o_ref[b] = h[b * S: b * S + L_final, :].astype(o_ref.dtype)
        L_i = L_next


def _pack_tcn_params(params, kernel_size, c_pad):
    """Zero-pad all level weights/biases to a common lane-dense shape."""
    k = kernel_size
    w_stack, b_stack = [], []
    for w, b in params:                       # w: (K, in_c, out_c), b: (out_c,)
        _, in_c, out_c = w.shape
        wp = jnp.zeros((k, c_pad, c_pad), jnp.float32).at[:, :in_c, :out_c].set(w)
        w_stack.append(wp.reshape(k * c_pad, c_pad))
        b_stack.append(jnp.zeros((1, c_pad), jnp.float32).at[0, :out_c].set(b))
    return jnp.stack(w_stack), jnp.stack(b_stack)


def init_tcn_params(key, num_inputs, num_channels, kernel_size):
    """conv weight ~ N(0, 0.01) as in init_weights(); bias small uniform.

    Stored per level as (K, C_in, C_out)."""
    params = []
    in_c = num_inputs
    for out_c in num_channels:
        key, kw, kb = jax.random.split(key, 3)
        w = 0.01 * jax.random.normal(kw, (kernel_size, in_c, out_c), jnp.float32)
        bound = 1.0 / float(in_c * kernel_size) ** 0.5
        b = jax.random.uniform(kb, (out_c,), jnp.float32, -bound, bound)
        params.append((w, b))
        in_c = out_c
    return params


def temporal_conv_net(x_ncl, params, kernel_size, *,
                      compute_dtype=jnp.float32,  # set jnp.bfloat16 on v6e/v7x
                      batch_block=None,
                      vmem_budget_bytes=8 * 1024 * 1024):
    """Forward pass of TemporalConvNet.

    x_ncl: (N, C_in, L) PyTorch NCL layout -> (N, C_last, L + levels*(K-1)).
    """
    N, C_in, L0 = x_ncl.shape
    K = kernel_size
    p = K - 1
    levels = len(params)
    out_channels = [w.shape[2] for (w, _) in params]
    C_last = out_channels[-1]
    C_pad = _round_up(max([C_in] + out_channels), _LANE)
    L_final = L0 + levels * p
    S = _round_up(L_final, _SUBLANE)        # per-sequence row stride (>= L + gap)
    PF = _round_up(p, _SUBLANE)             # aligned zero front margin (>= K-1)

    w_packed, b_packed = _pack_tcn_params(params, K, C_pad)

    # Pick the largest batch tile (divisor of N) that fits the VMEM budget.
    if batch_block is None:
        NB = 1
        for nb in range(1, N + 1):
            if N % nb:
                continue
            rows = PF + nb * S
            vmem = (2 * rows * C_pad * 4                       # two scratch slabs
                    + 2 * nb * L0 * C_in * 4                   # input block (x2 buf)
                    + 2 * nb * L_final * C_pad * 4             # output block (x2 buf)
                    + 2 * levels * (K * C_pad * C_pad + C_pad) * 4)  # resident weights
            if vmem <= vmem_budget_bytes:
                NB = nb
    else:
        NB = batch_block
        assert N % NB == 0

    L_rows = PF + NB * S
    x_nlc = jnp.transpose(x_ncl, (0, 2, 1))   # (N, L, C_in)

    kernel = functools.partial(
        _fused_tcn_kernel, levels=levels, K=K, C_in=C_in, L0=L0,
        L_final=L_final, NB=NB, S=S, PF=PF, compute_dtype=compute_dtype)

    out_padded = pl.pallas_call(
        kernel,
        out_shape=jax.ShapeDtypeStruct((N, L_final, C_pad), x_ncl.dtype),
        grid_spec=pltpu.PrefetchScalarGridSpec(
            num_scalar_prefetch=0,
            grid=(N // NB,),
            in_specs=[
                pl.BlockSpec((NB, L0, C_in), lambda n: (n, 0, 0)),
                pl.BlockSpec((levels, K * C_pad, C_pad), lambda n: (0, 0, 0)),
                pl.BlockSpec((levels, 1, C_pad), lambda n: (0, 0, 0)),
            ],
            out_specs=pl.BlockSpec((NB, L_final, C_pad), lambda n: (n, 0, 0)),
            scratch_shapes=[
                pltpu.VMEM((L_rows, C_pad), jnp.float32),
                pltpu.VMEM((L_rows, C_pad), jnp.float32),
            ],
        ),
        compiler_params=pltpu.CompilerParams(
            dimension_semantics=("parallel",),
            vmem_limit_bytes=32 * 1024 * 1024,
        ),
    )(x_nlc, w_packed, b_packed)

    # Drop channel padding, return PyTorch NCL layout (XLA fuses slice+transpose).
    return jnp.transpose(out_padded[:, :, :C_last], (0, 2, 1))


def _reference_tcn(x_ncl, params, kernel_size):
    """Pure-JAX reference (XLA conv) matching the PyTorch forward."""
    k = kernel_size
    y = x_ncl
    for w, b in params:                       # w: (K, C_in, C_out)
        w_oik = jnp.transpose(w, (2, 1, 0))   # (C_out, C_in, K)
        y = jax.lax.conv_general_dilated(
            y, w_oik, window_strides=(1,), padding=[(k - 1, k - 1)],
            dimension_numbers=("NCH", "OIH", "NCH"),
            precision=jax.lax.Precision.HIGHEST)
        y = jnp.maximum(y + b[None, :, None], 0.0)
    return y


if __name__ == "__main__":
    key = jax.random.PRNGKey(0)
    k_x, k_p = jax.random.split(key)

    N, C_IN, L = 2, 4, 16
    NUM_CHANNELS = [8, 16]
    KERNEL_SIZE = 3

    x = jax.random.normal(k_x, (N, C_IN, L), jnp.float32)   # PyTorch NCL layout
    params = init_tcn_params(k_p, C_IN, NUM_CHANNELS, KERNEL_SIZE)

    out = temporal_conv_net(x, params, KERNEL_SIZE)
    out = jax.block_until_ready(out)

    # Shape check: each of the 2 levels grows L by (K-1)=2 -> L_out = 20.
    expected_shape = (N, NUM_CHANNELS[-1], L + len(NUM_CHANNELS) * (KERNEL_SIZE - 1))
    assert out.shape == expected_shape, (out.shape, expected_shape)
    assert bool(jnp.all(out >= 0.0)), "ReLU output must be non-negative"

    # Numerical check against a pure-JAX reference of the same forward pass.
    ref = _reference_tcn(x, params, KERNEL_SIZE)
    max_err = float(jnp.max(jnp.abs(out - ref)))
    assert jnp.allclose(out, ref, atol=1e-3, rtol=1e-3), max_err

    print("KERNEL_OK")
</pallas_src>

<mosaic_0001>
module attributes {stable_mosaic.version = 11 : i64} {
  func.func @_fused_tcn_kernel(%arg0: i32, %arg1: memref<2x16x4xf32, #tpu.memory_space<vmem>>, %arg2: memref<2x384x128xf32, #tpu.memory_space<vmem>>, %arg3: memref<2x1x128xf32, #tpu.memory_space<vmem>>, %arg4: memref<2x20x128xf32, #tpu.memory_space<vmem>>, %arg5: memref<56x128xf32, #tpu.memory_space<vmem>>, %arg6: memref<56x128xf32, #tpu.memory_space<vmem>>) attributes {dimension_semantics = [#tpu.dimension_semantics<parallel>], iteration_bounds = array<i64: 1>, scalar_prefetch = 0 : i64, scratch_operands = 2 : i64, tpu.core_type = #tpu.core_type<tc>, window_params = [{transform_indices = @transform_0, window_bounds = array<i64: 2, 16, 4>}, {pipeline_mode = #tpu.pipeline_mode<synchronous>, transform_indices = @transform_1, window_bounds = array<i64: 2, 384, 128>}, {pipeline_mode = #tpu.pipeline_mode<synchronous>, transform_indices = @transform_2, window_bounds = array<i64: 2, 1, 128>}, {transform_indices = @transform_3, window_bounds = array<i64: 2, 20, 128>}]} {
    %cst = arith.constant 0.000000e+00 : f32
    %0 = vector.broadcast %cst : f32 to vector<56x128xf32>
    %c0 = arith.constant 0 : index
    %c0_0 = arith.constant 0 : index
    %1 = vector.load %arg5[%c0, %c0_0] : memref<56x128xf32, #tpu.memory_space<vmem>>, vector<56x128xf32>
    tpu.vector_store %arg5[%c0, %c0_0], %0 {strides = array<i32>} : memref<56x128xf32, #tpu.memory_space<vmem>>, vector<56x128xf32>,
    %cst_1 = arith.constant 0.000000e+00 : f32
    %2 = vector.broadcast %cst_1 : f32 to vector<8x128xf32>
    %c0_2 = arith.constant 0 : index
    %c0_3 = arith.constant 0 : index
    %3 = vector.load %arg6[%c0_2, %c0_3] : memref<56x128xf32, #tpu.memory_space<vmem>>, vector<8x128xf32>
    tpu.vector_store %arg6[%c0_2, %c0_3], %2 {strides = array<i32>} : memref<56x128xf32, #tpu.memory_space<vmem>>, vector<8x128xf32>,
    %c0_4 = arith.constant 0 : index
    %c0_5 = arith.constant 0 : index
    %c0_6 = arith.constant 0 : index
    %4 = vector.load %arg1[%c0_4, %c0_5, %c0_6] : memref<2x16x4xf32, #tpu.memory_space<vmem>>, vector<1x16x4xf32>
    %5 = vector.shape_cast %4 : vector<1x16x4xf32> to vector<16x4xf32>
    %c8 = arith.constant 8 : index
    %c0_7 = arith.constant 0 : index
    %6 = vector.load %arg5[%c8, %c0_7] : memref<56x128xf32, #tpu.memory_space<vmem>>, vector<16x4xf32>
    tpu.vector_store %arg5[%c8, %c0_7], %5 {strides = array<i32>} : memref<56x128xf32, #tpu.memory_space<vmem>>, vector<16x4xf32>,
    %c1 = arith.constant 1 : index
    %c0_8 = arith.constant 0 : index
    %c0_9 = arith.constant 0 : index
    %7 = vector.load %arg1[%c1, %c0_8, %c0_9] : memref<2x16x4xf32, #tpu.memory_space<vmem>>, vector<1x16x4xf32>
    %8 = vector.shape_cast %7 : vector<1x16x4xf32> to vector<16x4xf32>
    %c32 = arith.constant 32 : index
    %c0_10 = arith.constant 0 : index
    %9 = vector.load %arg5[%c32, %c0_10] : memref<56x128xf32, #tpu.memory_space<vmem>>, vector<16x4xf32>
    tpu.vector_store %arg5[%c32, %c0_10], %8 {strides = array<i32>} : memref<56x128xf32, #tpu.memory_space<vmem>>, vector<16x4xf32>,
    %10 = tpu.iota {dimensions = array<i32: 0>} : vector<48x1xi32>
    %c24_i32 = arith.constant 24 : i32
    %c0_i32 = arith.constant 0 : i32
    %11 = arith.cmpi eq, %c24_i32, %c0_i32 : i32
    %c1_i32 = arith.constant 1 : i32
    %12 = arith.select %11, %c1_i32, %c24_i32 : i32
    %13 = vector.broadcast %12 : i32 to vector<48x1xi32>
    %14 = arith.remsi %10, %13 : vector<48x1xi32>
    %c0_i32_11 = arith.constant 0 : i32
    %15 = vector.broadcast %c0_i32_11 : i32 to vector<48x1xi32>
    %16 = arith.cmpi ne, %14, %15 : vector<48x1xi32>
    %c0_i32_12 = arith.constant 0 : i32
    %17 = vector.broadcast %c0_i32_12 : i32 to vector<48x1xi32>
    %18 = arith.cmpi slt, %14, %17 : vector<48x1xi32>
    %c0_i32_13 = arith.constant 0 : i32
    %19 = arith.cmpi slt, %12, %c0_i32_13 : i32
    %20 = vector.broadcast %19 : i1 to vector<48x1xi1>
    %21 = vector.broadcast %20 : vector<48x1xi1> to vector<48x1xi1>
    %22 = arith.xori %18, %21 : vector<48x1xi1>
    %23 = arith.andi %22, %16 : vector<48x1xi1>
    %24 = vector.broadcast %12 : i32 to vector<48x1xi32>
    %25 = arith.addi %14, %24 : vector<48x1xi32>
    %26 = arith.select %23, %25, %14 : vector<48x1xi1>, vector<48x1xi32>
    %c6 = arith.constant 6 : index
    %c0_14 = arith.constant 0 : index
    %27 = vector.load %arg5[%c6, %c0_14] : memref<56x128xf32, #tpu.memory_space<vmem>>, vector<48x128xf32>
    %c7 = arith.constant 7 : index
    %c0_15 = arith.constant 0 : index
    %28 = vector.load %arg5[%c7, %c0_15] : memref<56x128xf32, #tpu.memory_space<vmem>>, vector<48x128xf32>
    %c8_16 = arith.constant 8 : index
    %c0_17 = arith.constant 0 : index
    %29 = vector.load %arg5[%c8_16, %c0_17] : memref<56x128xf32, #tpu.memory_space<vmem>>, vector<48x128xf32>
    %30 = tpu.concatenate %27, %28, %29 in 1 : vector<48x128xf32>, vector<48x128xf32>, vector<48x128xf32> -> vector<48x384xf32>
    %c0_18 = arith.constant 0 : index
    %c0_19 = arith.constant 0 : index
    %c0_20 = arith.constant 0 : index
    %31 = vector.load %arg2[%c0_18, %c0_19, %c0_20] : memref<2x384x128xf32, #tpu.memory_space<vmem>>, vector<1x384x128xf32>
    %32 = vector.shape_cast %31 : vector<1x384x128xf32> to vector<384x128xf32>
    %cst_21 = arith.constant dense<0.000000e+00> : vector<48x128xf32>
    %33 = tpu.matmul %30, %32, %cst_21 {dimension_numbers = #tpu.dot_dimension_numbers<[1], [0], [0], [1], [0, 0, 1, 1], [], []>} : vector<48x384xf32>, vector<384x128xf32>, vector<48x128xf32> -> vector<48x128xf32>
    %c0_22 = arith.constant 0 : index
    %c0_23 = arith.constant 0 : index
    %c0_24 = arith.constant 0 : index
    %34 = vector.load %arg3[%c0_22, %c0_23, %c0_24] : memref<2x1x128xf32, #tpu.memory_space<vmem>>, vector<1x1x128xf32>
    %35 = vector.shape_cast %34 : vector<1x1x128xf32> to vector<1x128xf32>
    %36 = vector.broadcast %35 : vector<1x128xf32> to vector<48x128xf32>
    %37 = arith.addf %33, %36 : vector<48x128xf32>
    %cst_25 = arith.constant 0.000000e+00 : f32
    %38 = vector.broadcast %cst_25 : f32 to vector<48x128xf32>
    %39 = arith.maximumf %37, %38 : vector<48x128xf32>
    %c18_i32 = arith.constant 18 : i32
    %40 = vector.broadcast %c18_i32 : i32 to vector<48x1xi32>
    %41 = arith.cmpi slt, %26, %40 : vector<48x1xi32>
    %cst_26 = arith.constant 0.000000e+00 : f32
    %42 = vector.shape_cast %41 : vector<48x1xi1> to vector<48x1xi1>
    %43 = vector.broadcast %42 : vector<48x1xi1> to vector<48x128xi1>
    %44 = vector.broadcast %cst_26 : f32 to vector<48x128xf32>
    %45 = arith.select %43, %39, %44 : vector<48x128xi1>, vector<48x128xf32>
    %c8_27 = arith.constant 8 : index
    %c0_28 = arith.constant 0 : index
    %46 = vector.load %arg6[%c8_27, %c0_28] : memref<56x128xf32, #tpu.memory_space<vmem>>, vector<48x128xf32>
    tpu.vector_store %arg6[%c8_27, %c0_28], %45 {strides = array<i32>} : memref<56x128xf32, #tpu.memory_space<vmem>>, vector<48x128xf32>,
    %c6_29 = arith.constant 6 : index
    %c0_30 = arith.constant 0 : index
    %47 = vector.load %arg6[%c6_29, %c0_30] : memref<56x128xf32, #tpu.memory_space<vmem>>, vector<48x128xf32>
    %c7_31 = arith.constant 7 : index
    %c0_32 = arith.constant 0 : index
    %48 = vector.load %arg6[%c7_31, %c0_32] : memref<56x128xf32, #tpu.memory_space<vmem>>, vector<48x128xf32>
    %c8_33 = arith.constant 8 : index
    %c0_34 = arith.constant 0 : index
    %49 = vector.load %arg6[%c8_33, %c0_34] : memref<56x128xf32, #tpu.memory_space<vmem>>, vector<48x128xf32>
    %50 = tpu.concatenate %47, %48, %49 in 1 : vector<48x128xf32>, vector<48x128xf32>, vector<48x128xf32> -> vector<48x384xf32>
    %c1_35 = arith.constant 1 : index
    %c0_36 = arith.constant 0 : index
    %c0_37 = arith.constant 0 : index
    %51 = vector.load %arg2[%c1_35, %c0_36, %c0_37] : memref<2x384x128xf32, #tpu.memory_space<vmem>>, vector<1x384x128xf32>
    %52 = vector.shape_cast %51 : vector<1x384x128xf32> to vector<384x128xf32>
    %cst_38 = arith.constant dense<0.000000e+00> : vector<48x128xf32>
    %53 = tpu.matmul %50, %52, %cst_38 {dimension_numbers = #tpu.dot_dimension_numbers<[1], [0], [0], [1], [0, 0, 1, 1], [], []>} : vector<48x384xf32>, vector<384x128xf32>, vector<48x128xf32> -> vector<48x128xf32>
    %c1_39 = arith.constant 1 : index
    %c0_40 = arith.constant 0 : index
    %c0_41 = arith.constant 0 : index
    %54 = vector.load %arg3[%c1_39, %c0_40, %c0_41] : memref<2x1x128xf32, #tpu.memory_space<vmem>>, vector<1x1x128xf32>
    %55 = vector.shape_cast %54 : vector<1x1x128xf32> to vector<1x128xf32>
    %56 = vector.broadcast %55 : vector<1x128xf32> to vector<48x128xf32>
    %57 = arith.addf %53, %56 : vector<48x128xf32>
    %cst_42 = arith.constant 0.000000e+00 : f32
    %58 = vector.broadcast %cst_42 : f32 to vector<48x128xf32>
    %59 = arith.maximumf %57, %58 : vector<48x128xf32>
    %60 = vector.extract_strided_slice %59 {offsets = [0, 0], sizes = [20, 128], strides = [1, 1]} : vector<48x128xf32> to vector<20x128xf32>
    %c0_43 = arith.constant 0 : index
    %c0_44 = arith.constant 0 : index
    %c0_45 = arith.constant 0 : index
    %61 = vector.load %arg4[%c0_43, %c0_44, %c0_45] : memref<2x20x128xf32, #tpu.memory_space<vmem>>, vector<1x20x128xf32>
    %62 = vector.shape_cast %61 : vector<1x20x128xf32> to vector<20x128xf32>
    %63 = vector.shape_cast %60 : vector<20x128xf32> to vector<1x20x128xf32>
    tpu.vector_store %arg4[%c0_43, %c0_44, %c0_45], %63 {strides = array<i32>} : memref<2x20x128xf32, #tpu.memory_space<vmem>>, vector<1x20x128xf32>,
    %64 = vector.extract_strided_slice %59 {offsets = [24, 0], sizes = [20, 128], strides = [1, 1]} : vector<48x128xf32> to vector<20x128xf32>
    %c1_46 = arith.constant 1 : index
    %c0_47 = arith.constant 0 : index
    %c0_48 = arith.constant 0 : index
    %65 = vector.load %arg4[%c1_46, %c0_47, %c0_48] : memref<2x20x128xf32, #tpu.memory_space<vmem>>, vector<1x20x128xf32>
    %66 = vector.shape_cast %65 : vector<1x20x128xf32> to vector<20x128xf32>
    %67 = vector.shape_cast %64 : vector<20x128xf32> to vector<1x20x128xf32>
    tpu.vector_store %arg4[%c1_46, %c0_47, %c0_48], %67 {strides = array<i32>} : memref<2x20x128xf32, #tpu.memory_space<vmem>>, vector<1x20x128xf32>,
    return
  }
  func.func @transform_0(%arg0: i32) -> (i32, i32, i32) {
    %c0_i32 = arith.constant 0 : i32
    %c0_i32_0 = arith.constant 0 : i32
    %c0_i32_1 = arith.constant 0 : i32
    return %arg0, %c0_i32, %c0_i32_0 : i32, i32, i32
  }
  func.func @transform_1(%arg0: i32) -> (i32, i32, i32) {
    %c0_i32 = arith.constant 0 : i32
    %c0_i32_0 = arith.constant 0 : i32
    %c0_i32_1 = arith.constant 0 : i32
    %c0_i32_2 = arith.constant 0 : i32
    return %c0_i32, %c0_i32_0, %c0_i32_1 : i32, i32, i32
  }
  func.func @transform_2(%arg0: i32) -> (i32, i32, i32) {
    %c0_i32 = arith.constant 0 : i32
    %c0_i32_0 = arith.constant 0 : i32
    %c0_i32_1 = arith.constant 0 : i32
    %c0_i32_2 = arith.constant 0 : i32
    return %c0_i32, %c0_i32_0, %c0_i32_1 : i32, i32, i32
  }
  func.func @transform_3(%arg0: i32) -> (i32, i32, i32) {
    %c0_i32 = arith.constant 0 : i32
    %c0_i32_0 = arith.constant 0 : i32
    %c0_i32_1 = arith.constant 0 : i32
    return %arg0, %c0_i32, %c0_i32_0 : i32, i32, i32
  }
}

</mosaic_0001>

<llo_original>
// kernel: tpu_custom_call.1
$region0: #{tpu_custom_call.1}
  #allocation0 [shape = 'u32[]', space=smem, size = 0x4, offset = 0x4, fixed_abs, tag = 'smem constant byte address 0x4 - core index']
  #allocation1 [shape = 'u32[144,128]{1,0:T(1,128)}', space=vmem, size = 0x12000, scoped, tag = 'internal scratch']
  #allocation2 [shape = 'f32[56,128]{1,0:T(8,128)}', space=vmem, size = 0x7000, scoped, tag = 'scratch operand']
  #allocation3 [shape = 'f32[56,128]{1,0:T(8,128)}', space=vmem, size = 0x7000, scoped, tag = 'scratch operand']
  %s0 = inlined_call_operand.vmem [shape: f32[2,16,4], index: 0, kind: input, shape index: {}]
  %s1 = inlined_call_operand.hbm [shape: f32[2,384,128], index: 1, kind: input, shape index: {}]
  %s2 = inlined_call_operand.vmem [shape: f32[2,1,128], index: 2, kind: input, shape index: {}]
  %s3 = inlined_call_operand.vmem [shape: f32[2,20,128], index: 3, kind: output, shape index: {}]
  %s4 = sld [smem:[#allocation0]]
  $region26: #{tpu_custom_call.1} parent=0
    _
  %s6 = ssub.s32 1, %s4
  %s7 = scalar_select 0, %s6, %s4
  $region1: #{tpu_custom_call.1} parent=0
    #allocation4 [shape = 'u8[393216]{0}', space=vmem, size = 0x60000, scoped, tag = 'input window, operand 1, single buffered']
    #allocation5 [shape = 's32[1]{0}', space=sflag, size = 0x4, scoped, tag = 'scoped memory for tpu_custom_call.1']
    %8 = vsyncpa [#allocation5], 0
    // Predicated region
    $region2: #{tpu_custom_call.1} parent=1 // pred_check
      _
    $region3: #{tpu_custom_call.1} parent=1 // pred_check_branch
      %10 = sbr.rel (0) target = $region5
    $region4: #{tpu_custom_call.1} parent=1 // pred_region
      _
    $region5: #{tpu_custom_call.1} parent=1 // pred_fallthru
      _
    // Predicated region
    $region6: #{tpu_custom_call.1} parent=1 // pred_check
      _
    $region7: #{tpu_custom_call.1} parent=1 // pred_check_branch
      %12 = sbr.rel (0) target = $region9
    $region8: #{tpu_custom_call.1} parent=1 // pred_region
      %s14 = ssub.s32 12288, 12288
      %15 = vsyncadd [#allocation5], %s14
      %s16 = sshll.u32 [#allocation4], 4
      %s17 = int_to_ptr.vmem [resolvable:$true] %s16
      %22 = dma.hbm_to_vmem [thread:$0]  %s1, 12288, %s17, [#allocation5], 128, 128, 8
    $region9: #{tpu_custom_call.1} parent=1 // pred_fallthru
      _
    // Predicated region
    $region10: #{tpu_custom_call.1} parent=1 // pred_check
      _
    $region11: #{tpu_custom_call.1} parent=1 // pred_check_branch
      %24 = sbr.rel (0) target = $region13
    $region12: #{tpu_custom_call.1} parent=1 // pred_region
      _
    $region13: #{tpu_custom_call.1} parent=1 // pred_fallthru
      _
    // Predicated region
    $region14: #{tpu_custom_call.1} parent=1 // pred_check
      _
    $region15: #{tpu_custom_call.1} parent=1 // pred_check_branch
      %26 = sbr.rel (0) target = $region17
    $region16: #{tpu_custom_call.1} parent=1 // pred_region
      %27 = dma.done [#allocation5], 12288
    $region17: #{tpu_custom_call.1} parent=1 // pred_fallthru
      _
    %28 = vst [vmem:[#allocation2] sm:$0xff] 0.0
    %29 = vst [vmem:[#allocation2 + $0x8] sm:$0xff] 0.0
    %30 = vst [vmem:[#allocation2 + $0x10] sm:$0xff] 0.0
    %31 = vst [vmem:[#allocation2 + $0x18] sm:$0xff] 0.0
    %32 = vst [vmem:[#allocation2 + $0x20] sm:$0xff] 0.0
    %33 = vst [vmem:[#allocation2 + $0x28] sm:$0xff] 0.0
    %34 = vst [vmem:[#allocation2 + $0x30] sm:$0xff] 0.0
    %35 = vst [vmem:[#allocation3] sm:$0xff] 0.0
    %v36 = vld [vmem:[%s0] sm:$0xff]
    %v37 = vld [vmem:[%s0 + $0x8] sm:$0xff]
    %vm38 = vcmask 31744
    %39 = vst.msk [vmem:[#allocation2 + $0x8] sm:$0xff] %vm38, %v36
    %40 = vst.msk [vmem:[#allocation2 + $0x10] sm:$0xff] %vm38, %v37
    %s41 = scalar_lea.vmem %s0, 16
    %v42 = vld [vmem:[%s41] sm:$0xff]
    %v43 = vld [vmem:[%s41 + $0x8] sm:$0xff]
    %44 = vst.msk [vmem:[#allocation2 + $0x20] sm:$0xff] %vm38, %v42
    %45 = vst.msk [vmem:[#allocation2 + $0x28] sm:$0xff] %vm38, %v43
    %v46 = vlaneseq
    %v47 = vshrl.u32 %v46, 7
    %v48 = vadd.s32 %v47, 8
    %v49 = vadd.s32 %v47, 16
    %v50 = vadd.s32 %v47, 24
    %v51 = vadd.s32 %v47, 32
    %v52 = vadd.s32 %v47, 40
    %vm53 = vcmp.lt.s32.totalorder %v47, 0
    %v54 = vsub.s32 0, %v47
    %v55 = vsel %vm53, %v54, %v47
    %v56 = vmul.u32.u64.compose %v55, 2863311531
    %v57 = vextract.low.u32 %v56
    %v58 = vextract.high.u32 %v56
    %v59 = vshrl.u32 %v58, 4
    %v60 = vmul.u32 %v59, 24
    %v61 = vsub.s32 %v55, %v60
    %v62 = vsub.s32 0, %v61
    %v63 = vsel %vm53, %v62, %v61
    %vm64 = vcmp.lt.s32.totalorder %v48, 0
    %v65 = vsub.s32 0, %v48
    %v66 = vsel %vm64, %v65, %v48
    %v67 = vmul.u32.u64.compose %v66, 2863311531
    %v68 = vextract.low.u32 %v67
    %v69 = vextract.high.u32 %v67
    %v70 = vshrl.u32 %v69, 4
    %v71 = vmul.u32 %v70, 24
    %v72 = vsub.s32 %v66, %v71
    %v73 = vsub.s32 0, %v72
    %v74 = vsel %vm64, %v73, %v72
    %vm75 = vcmp.lt.s32.totalorder %v49, 0
    %v76 = vsub.s32 0, %v49
    %v77 = vsel %vm75, %v76, %v49
    %v78 = vmul.u32.u64.compose %v77, 2863311531
    %v79 = vextract.low.u32 %v78
    %v80 = vextract.high.u32 %v78
    %v81 = vshrl.u32 %v80, 4
    %v82 = vmul.u32 %v81, 24
    %v83 = vsub.s32 %v77, %v82
    %v84 = vsub.s32 0, %v83
    %v85 = vsel %vm75, %v84, %v83
    %vm86 = vcmp.lt.s32.totalorder %v50, 0
    %v87 = vsub.s32 0, %v50
    %v88 = vsel %vm86, %v87, %v50
    %v89 = vmul.u32.u64.compose %v88, 2863311531
    %v90 = vextract.low.u32 %v89
    %v91 = vextract.high.u32 %v89
    %v92 = vshrl.u32 %v91, 4
    %v93 = vmul.u32 %v92, 24
    %v94 = vsub.s32 %v88, %v93
    %v95 = vsub.s32 0, %v94
    %v96 = vsel %vm86, %v95, %v94
    %vm97 = vcmp.lt.s32.totalorder %v51, 0
    %v98 = vsub.s32 0, %v51
    %v99 = vsel %vm97, %v98, %v51
    %v100 = vmul.u32.u64.compose %v99, 2863311531
    %v101 = vextract.low.u32 %v100
    %v102 = vextract.high.u32 %v100
    %v103 = vshrl.u32 %v102, 4
    %v104 = vmul.u32 %v103, 24
    %v105 = vsub.s32 %v99, %v104
    %v106 = vsub.s32 0, %v105
    %v107 = vsel %vm97, %v106, %v105
    %vm108 = vcmp.lt.s32.totalorder %v52, 0
    %v109 = vsub.s32 0, %v52
    %v110 = vsel %vm108, %v109, %v52
    %v111 = vmul.u32.u64.compose %v110, 2863311531
    %v112 = vextract.low.u32 %v111
    %v113 = vextract.high.u32 %v111
    %v114 = vshrl.u32 %v113, 4
    %v115 = vmul.u32 %v114, 24
    %v116 = vsub.s32 %v110, %v115
    %v117 = vsub.s32 0, %v116
    %v118 = vsel %vm108, %v117, %v116
    %vm119 = vcmp.ne.s32.totalorder %v63, 0
    %vm120 = vcmp.ne.s32.totalorder %v74, 0
    %vm121 = vcmp.ne.s32.totalorder %v85, 0
    %vm122 = vcmp.ne.s32.totalorder %v96, 0
    %vm123 = vcmp.ne.s32.totalorder %v107, 0
    %vm124 = vcmp.ne.s32.totalorder %v118, 0
    %vm125 = vcmp.lt.s32.totalorder %v63, 0
    %vm126 = vcmp.lt.s32.totalorder %v74, 0
    %vm127 = vcmp.lt.s32.totalorder %v85, 0
    %vm128 = vcmp.lt.s32.totalorder %v96, 0
    %vm129 = vcmp.lt.s32.totalorder %v107, 0
    %vm130 = vcmp.lt.s32.totalorder %v118, 0
    %vm131 = vmand %vm125, %vm119
    %vm132 = vmand %vm126, %vm120
    %vm133 = vmand %vm127, %vm121
    %vm134 = vmand %vm128, %vm122
    %vm135 = vmand %vm129, %vm123
    %vm136 = vmand %vm130, %vm124
    %v137 = vadd.s32 %v63, 24
    %v138 = vadd.s32 %v74, 24
    %v139 = vadd.s32 %v85, 24
    %v140 = vadd.s32 %v96, 24
    %v141 = vadd.s32 %v107, 24
    %v142 = vadd.s32 %v118, 24
    %v143 = vsel %vm131, %v137, %v63
    %v144 = vsel %vm132, %v138, %v74
    %v145 = vsel %vm133, %v139, %v85
    %v146 = vsel %vm134, %v140, %v96
    %v147 = vsel %vm135, %v141, %v107
    %v148 = vsel %vm136, %v142, %v118
    %v149 = vld [vmem:[#allocation2 + $0x6] sm:$0xff]
    %v150 = vld [vmem:[#allocation2 + $0xe] sm:$0xff]
    %v151 = vld [vmem:[#allocation2 + $0x16] sm:$0xff]
    %v152 = vld [vmem:[#allocation2 + $0x1e] sm:$0xff]
    %v153 = vld [vmem:[#allocation2 + $0x26] sm:$0xff]
    %v154 = vld [vmem:[#allocation2 + $0x2e] sm:$0xff]
    %v155 = vld [vmem:[#allocation2 + $0x7] sm:$0xff]
    %v156 = vld [vmem:[#allocation2 + $0xf] sm:$0xff]
    %v157 = vld [vmem:[#allocation2 + $0x17] sm:$0xff]
    %v158 = vld [vmem:[#allocation2 + $0x1f] sm:$0xff]
    %v159 = vld [vmem:[#allocation2 + $0x27] sm:$0xff]
    %v160 = vld [vmem:[#allocation2 + $0x2f] sm:$0xff]
    %v161 = vld [vmem:[#allocation2 + $0x8] sm:$0xff]
    %v162 = vld [vmem:[#allocation2 + $0x10] sm:$0xff]
    %v163 = vld [vmem:[#allocation2 + $0x18] sm:$0xff]
    %v164 = vld [vmem:[#allocation2 + $0x20] sm:$0xff]
    %v165 = vld [vmem:[#allocation2 + $0x28] sm:$0xff]
    %v166 = vld [vmem:[#allocation2 + $0x30] sm:$0xff]
    %v167 = vld [vmem:[#allocation4] sm:$0xff]
    %v168 = vld [vmem:[#allocation4 + $0x8] sm:$0xff]
    %v169 = vld [vmem:[#allocation4 + $0x10] sm:$0xff]
    %v170 = vld [vmem:[#allocation4 + $0x18] sm:$0xff]
    %v171 = vld [vmem:[#allocation4 + $0x20] sm:$0xff]
    %v172 = vld [vmem:[#allocation4 + $0x28] sm:$0xff]
    %v173 = vld [vmem:[#allocation4 + $0x30] sm:$0xff]
    %v174 = vld [vmem:[#allocation4 + $0x38] sm:$0xff]
    %v175 = vld [vmem:[#allocation4 + $0x40] sm:$0xff]
    %v176 = vld [vmem:[#allocation4 + $0x48] sm:$0xff]
    %v177 = vld [vmem:[#allocation4 + $0x50] sm:$0xff]
    %v178 = vld [vmem:[#allocation4 + $0x58] sm:$0xff]
    %v179 = vld [vmem:[#allocation4 + $0x60] sm:$0xff]
    %v180 = vld [vmem:[#allocation4 + $0x68] sm:$0xff]
    %v181 = vld [vmem:[#allocation4 + $0x70] sm:$0xff]
    %v182 = vld [vmem:[#allocation4 + $0x78] sm:$0xff]
    %v183 = vld [vmem:[#allocation4 + $0x80] sm:$0xff]
    %v184 = vld [vmem:[#allocation4 + $0x88] sm:$0xff]
    %v185 = vld [vmem:[#allocation4 + $0x90] sm:$0xff]
    %v186 = vld [vmem:[#allocation4 + $0x98] sm:$0xff]
    %v187 = vld [vmem:[#allocation4 + $0xa0] sm:$0xff]
    %v188 = vld [vmem:[#allocation4 + $0xa8] sm:$0xff]
    %v189 = vld [vmem:[#allocation4 + $0xb0] sm:$0xff]
    %v190 = vld [vmem:[#allocation4 + $0xb8] sm:$0xff]
    %v191 = vld [vmem:[#allocation4 + $0xc0] sm:$0xff]
    %v192 = vld [vmem:[#allocation4 + $0xc8] sm:$0xff]
    %v193 = vld [vmem:[#allocation4 + $0xd0] sm:$0xff]
    %v194 = vld [vmem:[#allocation4 + $0xd8] sm:$0xff]
    %v195 = vld [vmem:[#allocation4 + $0xe0] sm:$0xff]
    %v196 = vld [vmem:[#allocation4 + $0xe8] sm:$0xff]
    %v197 = vld [vmem:[#allocation4 + $0xf0] sm:$0xff]
    %v198 = vld [vmem:[#allocation4 + $0xf8] sm:$0xff]
    %v199 = vld [vmem:[#allocation4 + $0x100] sm:$0xff]
    %v200 = vld [vmem:[#allocation4 + $0x108] sm:$0xff]
    %v201 = vld [vmem:[#allocation4 + $0x110] sm:$0xff]
    %v202 = vld [vmem:[#allocation4 + $0x118] sm:$0xff]
    %v203 = vld [vmem:[#allocation4 + $0x120] sm:$0xff]
    %v204 = vld [vmem:[#allocation4 + $0x128] sm:$0xff]
    %v205 = vld [vmem:[#allocation4 + $0x130] sm:$0xff]
    %v206 = vld [vmem:[#allocation4 + $0x138] sm:$0xff]
    %v207 = vld [vmem:[#allocation4 + $0x140] sm:$0xff]
    %v208 = vld [vmem:[#allocation4 + $0x148] sm:$0xff]
    %v209 = vld [vmem:[#allocation4 + $0x150] sm:$0xff]
    %v210 = vld [vmem:[#allocation4 + $0x158] sm:$0xff]
    %v211 = vld [vmem:[#allocation4 + $0x160] sm:$0xff]
    %v212 = vld [vmem:[#allocation4 + $0x168] sm:$0xff]
    %v213 = vld [vmem:[#allocation4 + $0x170] sm:$0xff]
    %v214 = vld [vmem:[#allocation4 + $0x178] sm:$0xff]
    %v215 = vld [vmem:[%s2] sm:$0x1]
    %v217 = vlaneseq
    %v218 = vshrl.u32 %v217, 7
    %v219 = vsub.s32 0, %v218
    %v220 = vrot.slane %v215, %v219
    %222 = vmatprep.subr.mxu0 0.0
    %223 = vmatpush1.msra.mxu0 %v167
    %224 = vmatprep.subr.mxu0 0.0
    %225 = vmatpush1.msra.mxu0 %v168
    %226 = vmatprep.subr.mxu0 0.0
    %227 = vmatpush1.msra.mxu0 %v169
    %228 = vmatprep.subr.mxu0 0.0
    %229 = vmatpush1.msra.mxu0 %v170
    %230 = vmatprep.subr.mxu0 0.0
    %231 = vmatpush1.msra.mxu0 %v171
    %232 = vmatprep.subr.mxu0 0.0
    %233 = vmatpush1.msra.mxu0 %v172
    %234 = vmatprep.subr.mxu0 0.0
    %235 = vmatpush1.msra.mxu0 %v173
    %236 = vmatprep.subr.mxu0 0.0
    %237 = vmatpush1.msra.mxu0 %v174
    %238 = vmatprep.subr.mxu0 0.0
    %239 = vmatpush1.msra.mxu0 %v175
    %240 = vmatprep.subr.mxu0 0.0
    %241 = vmatpush1.msra.mxu0 %v176
    %242 = vmatprep.subr.mxu0 0.0
    %243 = vmatpush1.msra.mxu0 %v177
    %244 = vmatprep.subr.mxu0 0.0
    %245 = vmatpush1.msra.mxu0 %v178
    %246 = vmatprep.subr.mxu0 0.0
    %247 = vmatpush1.msra.mxu0 %v179
    %248 = vmatprep.subr.mxu0 0.0
    %249 = vmatpush1.msra.mxu0 %v180
    %250 = vmatprep.subr.mxu0 0.0
    %251 = vmatpush1.msra.mxu0 %v181
    %252 = vmatprep.subr.mxu0 0.0
    %253 = vmatpush1.msra.mxu0 %v182
    %254 = vmatprep.subr.mxu0 0.0
    %255 = vmatpush1.msra.mxu0 %v183
    %256 = vmatprep.subr.mxu0 0.0
    %257 = vmatpush1.msra.mxu0 %v184
    %258 = vmatprep.subr.mxu0 0.0
    %259 = vmatpush1.msra.mxu0 %v185
    %260 = vmatprep.subr.mxu0 0.0
    %261 = vmatpush1.msra.mxu0 %v186
    %262 = vmatprep.subr.mxu0 0.0
    %263 = vmatpush1.msra.mxu0 %v187
    %264 = vmatprep.subr.mxu0 0.0
    %265 = vmatpush1.msra.mxu0 %v188
    %266 = vmatprep.subr.mxu0 0.0
    %267 = vmatpush1.msra.mxu0 %v189
    %268 = vmatprep.subr.mxu0 0.0
    %269 = vmatpush1.msra.mxu0 %v190
    %270 = vmatprep.subr.mxu0 0.0
    %271 = vmatpush1.msra.mxu0 %v191
    %272 = vmatprep.subr.mxu0 0.0
    %273 = vmatpush1.msra.mxu0 %v192
    %274 = vmatprep.subr.mxu0 0.0
    %275 = vmatpush1.msra.mxu0 %v193
    %276 = vmatprep.subr.mxu0 0.0
    %277 = vmatpush1.msra.mxu0 %v194
    %278 = vmatprep.subr.mxu0 0.0
    %279 = vmatpush1.msra.mxu0 %v195
    %280 = vmatprep.subr.mxu0 0.0
    %281 = vmatpush1.msra.mxu0 %v196
    %282 = vmatprep.subr.mxu0 0.0
    %283 = vmatpush1.msra.mxu0 %v197
    %284 = vmatprep.subr.mxu0 0.0
    %285 = vmatpush1.msra.mxu0 %v198
    %286 = vmatprep.mubr.f32.mxu0 %v155
    %287 = vmatmul.mubr.f32.gmra.mrb[0].mxu0 %v149
    %v288 = vpop.f32.mrb[0].mxu0
    %v289 = vadd.f32 %v220, %v288
    %v290 = vpop.f32.mrb[0].mxu0
    %291 = vmatprep.mubr.f32.mxu0 %v156
    %292 = vmatmul.mubr.f32.gmra.mrb[0].mxu0 %v150
    %v293 = vpop.f32.mrb[0].mxu0
    %v294 = vadd.f32 %v220, %v293
    %v295 = vpop.f32.mrb[0].mxu0
    %296 = vmatprep.mubr.f32.mxu0 %v157
    %297 = vmatmul.mubr.f32.gmra.mrb[0].mxu0 %v151
    %v298 = vpop.f32.mrb[0].mxu0
    %v299 = vadd.f32 %v220, %v298
    %v300 = vpop.f32.mrb[0].mxu0
    %301 = vmatprep.mubr.f32.mxu0 %v158
    %302 = vmatmul.mubr.f32.gmra.mrb[0].mxu0 %v152
    %v303 = vpop.f32.mrb[0].mxu0
    %v304 = vadd.f32 %v220, %v303
    %v305 = vpop.f32.mrb[0].mxu0
    %306 = vmatprep.mubr.f32.mxu0 %v159
    %307 = vmatmul.mubr.f32.gmra.mrb[0].mxu0 %v153
    %v308 = vpop.f32.mrb[0].mxu0
    %v309 = vadd.f32 %v220, %v308
    %v310 = vpop.f32.mrb[0].mxu0
    %311 = vmatprep.mubr.f32.mxu0 %v160
    %312 = vmatmul.mubr.f32.gmra.mrb[0].mxu0 %v154
    %v313 = vpop.f32.mrb[0].mxu0
    %v314 = vadd.f32 %v220, %v313
    %v315 = vpop.f32.mrb[0].mxu0
    %316 = vdwg.mxu0
    %317 = vmatprep.subr.mxu0 0.0
    %318 = vmatpush1.msra.mxu0 %v199
    %319 = vmatprep.subr.mxu0 0.0
    %320 = vmatpush1.msra.mxu0 %v200
    %321 = vmatprep.subr.mxu0 0.0
    %322 = vmatpush1.msra.mxu0 %v201
    %323 = vmatprep.subr.mxu0 0.0
    %324 = vmatpush1.msra.mxu0 %v202
    %325 = vmatprep.subr.mxu0 0.0
    %326 = vmatpush1.msra.mxu0 %v203
    %327 = vmatprep.subr.mxu0 0.0
    %328 = vmatpush1.msra.mxu0 %v204
    %329 = vmatprep.subr.mxu0 0.0
    %330 = vmatpush1.msra.mxu0 %v205
    %331 = vmatprep.subr.mxu0 0.0
    %332 = vmatpush1.msra.mxu0 %v206
    %333 = vmatprep.subr.mxu0 0.0
    %334 = vmatpush1.msra.mxu0 %v207
    %335 = vmatprep.subr.mxu0 0.0
    %336 = vmatpush1.msra.mxu0 %v208
    %337 = vmatprep.subr.mxu0 0.0
    %338 = vmatpush1.msra.mxu0 %v209
    %339 = vmatprep.subr.mxu0 0.0
    %340 = vmatpush1.msra.mxu0 %v210
    %341 = vmatprep.subr.mxu0 0.0
    %342 = vmatpush1.msra.mxu0 %v211
    %343 = vmatprep.subr.mxu0 0.0
    %344 = vmatpush1.msra.mxu0 %v212
    %345 = vmatprep.subr.mxu0 0.0
    %346 = vmatpush1.msra.mxu0 %v213
    %347 = vmatprep.subr.mxu0 0.0
    %348 = vmatpush1.msra.mxu0 %v214
    %349 = vmatprep.subr.mxu0 0.0
    %350 = vmatpush1.msra.mxu0 0.0
    %351 = vmatprep.subr.mxu0 0.0
    %352 = vmatpush1.msra.mxu0 0.0
    %353 = vmatprep.subr.mxu0 0.0
    %354 = vmatpush1.msra.mxu0 0.0
    %355 = vmatprep.subr.mxu0 0.0
    %356 = vmatpush1.msra.mxu0 0.0
    %357 = vmatprep.subr.mxu0 0.0
    %358 = vmatpush1.msra.mxu0 0.0
    %359 = vmatprep.subr.mxu0 0.0
    %360 = vmatpush1.msra.mxu0 0.0
    %361 = vmatprep.subr.mxu0 0.0
    %362 = vmatpush1.msra.mxu0 0.0
    %363 = vmatprep.subr.mxu0 0.0
    %364 = vmatpush1.msra.mxu0 0.0
    %365 = vmatprep.subr.mxu0 0.0
    %366 = vmatpush1.msra.mxu0 0.0
    %367 = vmatprep.subr.mxu0 0.0
    %368 = vmatpush1.msra.mxu0 0.0
    %369 = vmatprep.subr.mxu0 0.0
    %370 = vmatpush1.msra.mxu0 0.0
    %371 = vmatprep.subr.mxu0 0.0
    %372 = vmatpush1.msra.mxu0 0.0
    %373 = vmatprep.subr.mxu0 0.0
    %374 = vmatpush1.msra.mxu0 0.0
    %375 = vmatprep.subr.mxu0 0.0
    %376 = vmatpush1.msra.mxu0 0.0
    %377 = vmatprep.subr.mxu0 0.0
    %378 = vmatpush1.msra.mxu0 0.0
    %379 = vmatprep.subr.mxu0 0.0
    %380 = vmatpush1.msra.mxu0 0.0
    %381 = vmatprep.mubr.f32.mxu0 0.0
    %382 = vmatmul.mubr.f32.gmra.mrb[0].mxu0 %v161
    %v383 = vpop.f32.mrb[0].mxu0
    %v384 = vadd.f32 %v289, %v383
    %v385 = vpop.f32.mrb[0].mxu0
    %386 = vmatprep.mubr.f32.mxu0 0.0
    %387 = vmatmul.mubr.f32.gmra.mrb[0].mxu0 %v162
    %v388 = vpop.f32.mrb[0].mxu0
    %v389 = vadd.f32 %v294, %v388
    %v390 = vpop.f32.mrb[0].mxu0
    %391 = vmatprep.mubr.f32.mxu0 0.0
    %392 = vmatmul.mubr.f32.gmra.mrb[0].mxu0 %v163
    %v393 = vpop.f32.mrb[0].mxu0
    %v394 = vadd.f32 %v299, %v393
    %v395 = vpop.f32.mrb[0].mxu0
    %396 = vmatprep.mubr.f32.mxu0 0.0
    %397 = vmatmul.mubr.f32.gmra.mrb[0].mxu0 %v164
    %v398 = vpop.f32.mrb[0].mxu0
    %v399 = vadd.f32 %v304, %v398
    %v400 = vpop.f32.mrb[0].mxu0
    %401 = vmatprep.mubr.f32.mxu0 0.0
    %402 = vmatmul.mubr.f32.gmra.mrb[0].mxu0 %v165
    %v403 = vpop.f32.mrb[0].mxu0
    %v404 = vadd.f32 %v309, %v403
    %v405 = vpop.f32.mrb[0].mxu0
    %406 = vmatprep.mubr.f32.mxu0 0.0
    %407 = vmatmul.mubr.f32.gmra.mrb[0].mxu0 %v166
    %v408 = vpop.f32.mrb[0].mxu0
    %v409 = vadd.f32 %v314, %v408
    %v410 = vpop.f32.mrb[0].mxu0
    %411 = vdwg.mxu0
    %v412 = vmax.f32 %v384, 0.0
    %v413 = vmax.f32 %v389, 0.0
    %v414 = vmax.f32 %v394, 0.0
    %v415 = vmax.f32 %v399, 0.0
    %v416 = vmax.f32 %v404, 0.0
    %v417 = vmax.f32 %v409, 0.0
    %vm418 = vcmp.lt.s32.totalorder %v143, 18
    %vm419 = vcmp.lt.s32.totalorder %v144, 18
    %vm420 = vcmp.lt.s32.totalorder %v145, 18
    %vm421 = vcmp.lt.s32.totalorder %v146, 18
    %vm422 = vcmp.lt.s32.totalorder %v147, 18
    %vm423 = vcmp.lt.s32.totalorder %v148, 18
    %v424 = vsel %vm418, 1, 0
    %v425 = vsel %vm419, 1, 0
    %v426 = vsel %vm420, 1, 0
    %v427 = vsel %vm421, 1, 0
    %v428 = vsel %vm422, 1, 0
    %v429 = vsel %vm423, 1, 0
    %vm430 = vcmp.eq.s32.totalorder %v424, 1
    %vm431 = vcmp.eq.s32.totalorder %v425, 1
    %vm432 = vcmp.eq.s32.totalorder %v426, 1
    %vm433 = vcmp.eq.s32.totalorder %v427, 1
    %vm434 = vcmp.eq.s32.totalorder %v428, 1
    %vm435 = vcmp.eq.s32.totalorder %v429, 1
    %v436 = vsel %vm430, %v412, 0.0
    %v437 = vsel %vm431, %v413, 0.0
    %v438 = vsel %vm432, %v414, 0.0
    %v439 = vsel %vm433, %v415, 0.0
    %v440 = vsel %vm434, %v416, 0.0
    %v441 = vsel %vm435, %v417, 0.0
    %442 = vst [vmem:[#allocation3 + $0x8] sm:$0xff] %v436
    %443 = vst [vmem:[#allocation3 + $0x10] sm:$0xff] %v437
    %444 = vst [vmem:[#allocation3 + $0x18] sm:$0xff] %v438
    %445 = vst [vmem:[#allocation3 + $0x20] sm:$0xff] %v439
    %446 = vst [vmem:[#allocation3 + $0x28] sm:$0xff] %v440
    %447 = vst [vmem:[#allocation3 + $0x30] sm:$0xff] %v441
    %v448 = vld [vmem:[#allocation3 + $0x6] sm:$0xff]
    %v449 = vld [vmem:[#allocation3 + $0xe] sm:$0xff]
    %v450 = vld [vmem:[#allocation3 + $0x16] sm:$0xff]
    %v451 = vld [vmem:[#allocation3 + $0x1e] sm:$0xff]
    %v452 = vld [vmem:[#allocation3 + $0x26] sm:$0xff]
    %v453 = vld [vmem:[#allocation3 + $0x2e] sm:$0xff]
    %v454 = vld [vmem:[#allocation3 + $0x7] sm:$0xff]
    %v455 = vld [vmem:[#allocation3 + $0xf] sm:$0xff]
    %v456 = vld [vmem:[#allocation3 + $0x17] sm:$0xff]
    %v457 = vld [vmem:[#allocation3 + $0x1f] sm:$0xff]
    %v458 = vld [vmem:[#allocation3 + $0x27] sm:$0xff]
    %v459 = vld [vmem:[#allocation3 + $0x2f] sm:$0xff]
    %v460 = vld [vmem:[#allocation3 + $0x8] sm:$0xff]
    %v461 = vld [vmem:[#allocation3 + $0x10] sm:$0xff]
    %v462 = vld [vmem:[#allocation3 + $0x18] sm:$0xff]
    %v463 = vld [vmem:[#allocation3 + $0x20] sm:$0xff]
    %v464 = vld [vmem:[#allocation3 + $0x28] sm:$0xff]
    %v465 = vld [vmem:[#allocation3 + $0x30] sm:$0xff]
    %s466 = scalar_lea.vmem [#allocation4], 384
    %v467 = vld [vmem:[%s466] sm:$0xff]
    %v468 = vld [vmem:[%s466 + $0x8] sm:$0xff]
    %v469 = vld [vmem:[%s466 + $0x10] sm:$0xff]
    %v470 = vld [vmem:[%s466 + $0x18] sm:$0xff]
    %v471 = vld [vmem:[%s466 + $0x20] sm:$0xff]
    %v472 = vld [vmem:[%s466 + $0x28] sm:$0xff]
    %v473 = vld [vmem:[%s466 + $0x30] sm:$0xff]
    %v474 = vld [vmem:[%s466 + $0x38] sm:$0xff]
    %v475 = vld [vmem:[%s466 + $0x40] sm:$0xff]
    %v476 = vld [vmem:[%s466 + $0x48] sm:$0xff]
    %v477 = vld [vmem:[%s466 + $0x50] sm:$0xff]
    %v478 = vld [vmem:[%s466 + $0x58] sm:$0xff]
    %v479 = vld [vmem:[%s466 + $0x60] sm:$0xff]
    %v480 = vld [vmem:[%s466 + $0x68] sm:$0xff]
    %v481 = vld [vmem:[%s466 + $0x70] sm:$0xff]
    %v482 = vld [vmem:[%s466 + $0x78] sm:$0xff]
    %v483 = vld [vmem:[%s466 + $0x80] sm:$0xff]
    %v484 = vld [vmem:[%s466 + $0x88] sm:$0xff]
    %v485 = vld [vmem:[%s466 + $0x90] sm:$0xff]
    %v486 = vld [vmem:[%s466 + $0x98] sm:$0xff]
    %v487 = vld [vmem:[%s466 + $0xa0] sm:$0xff]
    %v488 = vld [vmem:[%s466 + $0xa8] sm:$0xff]
    %v489 = vld [vmem:[%s466 + $0xb0] sm:$0xff]
    %v490 = vld [vmem:[%s466 + $0xb8] sm:$0xff]
    %v491 = vld [vmem:[%s466 + $0xc0] sm:$0xff]
    %v492 = vld [vmem:[%s466 + $0xc8] sm:$0xff]
    %v493 = vld [vmem:[%s466 + $0xd0] sm:$0xff]
    %v494 = vld [vmem:[%s466 + $0xd8] sm:$0xff]
    %v495 = vld [vmem:[%s466 + $0xe0] sm:$0xff]
    %v496 = vld [vmem:[%s466 + $0xe8] sm:$0xff]
    %v497 = vld [vmem:[%s466 + $0xf0] sm:$0xff]
    %v498 = vld [vmem:[%s466 + $0xf8] sm:$0xff]
    %v499 = vld [vmem:[%s466 + $0x100] sm:$0xff]
    %v500 = vld [vmem:[%s466 + $0x108] sm:$0xff]
    %v501 = vld [vmem:[%s466 + $0x110] sm:$0xff]
    %v502 = vld [vmem:[%s466 + $0x118] sm:$0xff]
    %v503 = vld [vmem:[%s466 + $0x120] sm:$0xff]
    %v504 = vld [vmem:[%s466 + $0x128] sm:$0xff]
    %v505 = vld [vmem:[%s466 + $0x130] sm:$0xff]
    %v506 = vld [vmem:[%s466 + $0x138] sm:$0xff]
    %v507 = vld [vmem:[%s466 + $0x140] sm:$0xff]
    %v508 = vld [vmem:[%s466 + $0x148] sm:$0xff]
    %v509 = vld [vmem:[%s466 + $0x150] sm:$0xff]
    %v510 = vld [vmem:[%s466 + $0x158] sm:$0xff]
    %v511 = vld [vmem:[%s466 + $0x160] sm:$0xff]
    %v512 = vld [vmem:[%s466 + $0x168] sm:$0xff]
    %v513 = vld [vmem:[%s466 + $0x170] sm:$0xff]
    %v514 = vld [vmem:[%s466 + $0x178] sm:$0xff]
    %s515 = scalar_lea.vmem %s2, 1
    %v516 = vld [vmem:[%s515] sm:$0x1]
    %v518 = vlaneseq
    %v519 = vshrl.u32 %v518, 7
    %v520 = vsub.s32 0, %v519
    %v521 = vrot.slane %v516, %v520
    %523 = vmatprep.subr.mxu0 0.0
    %524 = vmatpush1.msra.mxu0 %v467
    %525 = vmatprep.subr.mxu0 0.0
    %526 = vmatpush1.msra.mxu0 %v468
    %527 = vmatprep.subr.mxu0 0.0
    %528 = vmatpush1.msra.mxu0 %v469
    %529 = vmatprep.subr.mxu0 0.0
    %530 = vmatpush1.msra.mxu0 %v470
    %531 = vmatprep.subr.mxu0 0.0
    %532 = vmatpush1.msra.mxu0 %v471
    %533 = vmatprep.subr.mxu0 0.0
    %534 = vmatpush1.msra.mxu0 %v472
    %535 = vmatprep.subr.mxu0 0.0
    %536 = vmatpush1.msra.mxu0 %v473
    %537 = vmatprep.subr.mxu0 0.0
    %538 = vmatpush1.msra.mxu0 %v474
    %539 = vmatprep.subr.mxu0 0.0
    %540 = vmatpush1.msra.mxu0 %v475
    %541 = vmatprep.subr.mxu0 0.0
    %542 = vmatpush1.msra.mxu0 %v476
    %543 = vmatprep.subr.mxu0 0.0
    %544 = vmatpush1.msra.mxu0 %v477
    %545 = vmatprep.subr.mxu0 0.0
    %546 = vmatpush1.msra.mxu0 %v478
    %547 = vmatprep.subr.mxu0 0.0
    %548 = vmatpush1.msra.mxu0 %v479
    %549 = vmatprep.subr.mxu0 0.0
    %550 = vmatpush1.msra.mxu0 %v480
    %551 = vmatprep.subr.mxu0 0.0
    %552 = vmatpush1.msra.mxu0 %v481
    %553 = vmatprep.subr.mxu0 0.0
    %554 = vmatpush1.msra.mxu0 %v482
    %555 = vmatprep.subr.mxu0 0.0
    %556 = vmatpush1.msra.mxu0 %v483
    %557 = vmatprep.subr.mxu0 0.0
    %558 = vmatpush1.msra.mxu0 %v484
    %559 = vmatprep.subr.mxu0 0.0
    %560 = vmatpush1.msra.mxu0 %v485
    %561 = vmatprep.subr.mxu0 0.0
    %562 = vmatpush1.msra.mxu0 %v486
    %563 = vmatprep.subr.mxu0 0.0
    %564 = vmatpush1.msra.mxu0 %v487
    %565 = vmatprep.subr.mxu0 0.0
    %566 = vmatpush1.msra.mxu0 %v488
    %567 = vmatprep.subr.mxu0 0.0
    %568 = vmatpush1.msra.mxu0 %v489
    %569 = vmatprep.subr.mxu0 0.0
    %570 = vmatpush1.msra.mxu0 %v490
    %571 = vmatprep.subr.mxu0 0.0
    %572 = vmatpush1.msra.mxu0 %v491
    %573 = vmatprep.subr.mxu0 0.0
    %574 = vmatpush1.msra.mxu0 %v492
    %575 = vmatprep.subr.mxu0 0.0
    %576 = vmatpush1.msra.mxu0 %v493
    %577 = vmatprep.subr.mxu0 0.0
    %578 = vmatpush1.msra.mxu0 %v494
    %579 = vmatprep.subr.mxu0 0.0
    %580 = vmatpush1.msra.mxu0 %v495
    %581 = vmatprep.subr.mxu0 0.0
    %582 = vmatpush1.msra.mxu0 %v496
    %583 = vmatprep.subr.mxu0 0.0
    %584 = vmatpush1.msra.mxu0 %v497
    %585 = vmatprep.subr.mxu0 0.0
    %586 = vmatpush1.msra.mxu0 %v498
    %587 = vmatprep.mubr.f32.mxu0 %v454
    %588 = vmatmul.mubr.f32.gmra.mrb[0].mxu0 %v448
    %v589 = vpop.f32.mrb[0].mxu0
    %v590 = vadd.f32 %v521, %v589
    %v591 = vpop.f32.mrb[0].mxu0
    %592 = vmatprep.mubr.f32.mxu0 %v455
    %593 = vmatmul.mubr.f32.gmra.mrb[0].mxu0 %v449
    %v594 = vpop.f32.mrb[0].mxu0
    %v595 = vadd.f32 %v521, %v594
    %v596 = vpop.f32.mrb[0].mxu0
    %597 = vmatprep.mubr.f32.mxu0 %v456
    %598 = vmatmul.mubr.f32.gmra.mrb[0].mxu0 %v450
    %v599 = vpop.f32.mrb[0].mxu0
    %v600 = vadd.f32 %v521, %v599
    %v601 = vpop.f32.mrb[0].mxu0
    %602 = vmatprep.mubr.f32.mxu0 %v457
    %603 = vmatmul.mubr.f32.gmra.mrb[0].mxu0 %v451
    %v604 = vpop.f32.mrb[0].mxu0
    %v605 = vadd.f32 %v521, %v604
    %v606 = vpop.f32.mrb[0].mxu0
    %607 = vmatprep.mubr.f32.mxu0 %v458
    %608 = vmatmul.mubr.f32.gmra.mrb[0].mxu0 %v452
    %v609 = vpop.f32.mrb[0].mxu0
    %v610 = vadd.f32 %v521, %v609
    %v611 = vpop.f32.mrb[0].mxu0
    %612 = vmatprep.mubr.f32.mxu0 %v459
    %613 = vmatmul.mubr.f32.gmra.mrb[0].mxu0 %v453
    %v614 = vpop.f32.mrb[0].mxu0
    %v615 = vadd.f32 %v521, %v614
    %v616 = vpop.f32.mrb[0].mxu0
    %617 = vdwg.mxu0
    %618 = vmatprep.subr.mxu0 0.0
    %619 = vmatpush1.msra.mxu0 %v499
    %620 = vmatprep.subr.mxu0 0.0
    %621 = vmatpush1.msra.mxu0 %v500
    %622 = vmatprep.subr.mxu0 0.0
    %623 = vmatpush1.msra.mxu0 %v501
    %624 = vmatprep.subr.mxu0 0.0
    %625 = vmatpush1.msra.mxu0 %v502
    %626 = vmatprep.subr.mxu0 0.0
    %627 = vmatpush1.msra.mxu0 %v503
    %628 = vmatprep.subr.mxu0 0.0
    %629 = vmatpush1.msra.mxu0 %v504
    %630 = vmatprep.subr.mxu0 0.0
    %631 = vmatpush1.msra.mxu0 %v505
    %632 = vmatprep.subr.mxu0 0.0
    %633 = vmatpush1.msra.mxu0 %v506
    %634 = vmatprep.subr.mxu0 0.0
    %635 = vmatpush1.msra.mxu0 %v507
    %636 = vmatprep.subr.mxu0 0.0
    %637 = vmatpush1.msra.mxu0 %v508
    %638 = vmatprep.subr.mxu0 0.0
    %639 = vmatpush1.msra.mxu0 %v509
    %640 = vmatprep.subr.mxu0 0.0
    %641 = vmatpush1.msra.mxu0 %v510
    %642 = vmatprep.subr.mxu0 0.0
    %643 = vmatpush1.msra.mxu0 %v511
    %644 = vmatprep.subr.mxu0 0.0
    %645 = vmatpush1.msra.mxu0 %v512
    %646 = vmatprep.subr.mxu0 0.0
    %647 = vmatpush1.msra.mxu0 %v513
    %648 = vmatprep.subr.mxu0 0.0
    %649 = vmatpush1.msra.mxu0 %v514
    %650 = vmatprep.subr.mxu0 0.0
    %651 = vmatpush1.msra.mxu0 0.0
    %652 = vmatprep.subr.mxu0 0.0
    %653 = vmatpush1.msra.mxu0 0.0
    %654 = vmatprep.subr.mxu0 0.0
    %655 = vmatpush1.msra.mxu0 0.0
    %656 = vmatprep.subr.mxu0 0.0
    %657 = vmatpush1.msra.mxu0 0.0
    %658 = vmatprep.subr.mxu0 0.0
    %659 = vmatpush1.msra.mxu0 0.0
    %660 = vmatprep.subr.mxu0 0.0
    %661 = vmatpush1.msra.mxu0 0.0
    %662 = vmatprep.subr.mxu0 0.0
    %663 = vmatpush1.msra.mxu0 0.0
    %664 = vmatprep.subr.mxu0 0.0
    %665 = vmatpush1.msra.mxu0 0.0
    %666 = vmatprep.subr.mxu0 0.0
    %667 = vmatpush1.msra.mxu0 0.0
    %668 = vmatprep.subr.mxu0 0.0
    %669 = vmatpush1.msra.mxu0 0.0
    %670 = vmatprep.subr.mxu0 0.0
    %671 = vmatpush1.msra.mxu0 0.0
    %672 = vmatprep.subr.mxu0 0.0
    %673 = vmatpush1.msra.mxu0 0.0
    %674 = vmatprep.subr.mxu0 0.0
    %675 = vmatpush1.msra.mxu0 0.0
    %676 = vmatprep.subr.mxu0 0.0
    %677 = vmatpush1.msra.mxu0 0.0
    %678 = vmatprep.subr.mxu0 0.0
    %679 = vmatpush1.msra.mxu0 0.0
    %680 = vmatprep.subr.mxu0 0.0
    %681 = vmatpush1.msra.mxu0 0.0
    %682 = vmatprep.mubr.f32.mxu0 0.0
    %683 = vmatmul.mubr.f32.gmra.mrb[0].mxu0 %v460
    %v684 = vpop.f32.mrb[0].mxu0
    %v685 = vadd.f32 %v590, %v684
    %v686 = vpop.f32.mrb[0].mxu0
    %687 = vmatprep.mubr.f32.mxu0 0.0
    %688 = vmatmul.mubr.f32.gmra.mrb[0].mxu0 %v461
    %v689 = vpop.f32.mrb[0].mxu0
    %v690 = vadd.f32 %v595, %v689
    %v691 = vpop.f32.mrb[0].mxu0
    %692 = vmatprep.mubr.f32.mxu0 0.0
    %693 = vmatmul.mubr.f32.gmra.mrb[0].mxu0 %v462
    %v694 = vpop.f32.mrb[0].mxu0
    %v695 = vadd.f32 %v600, %v694
    %v696 = vpop.f32.mrb[0].mxu0
    %697 = vmatprep.mubr.f32.mxu0 0.0
    %698 = vmatmul.mubr.f32.gmra.mrb[0].mxu0 %v463
    %v699 = vpop.f32.mrb[0].mxu0
    %v700 = vadd.f32 %v605, %v699
    %v701 = vpop.f32.mrb[0].mxu0
    %702 = vmatprep.mubr.f32.mxu0 0.0
    %703 = vmatmul.mubr.f32.gmra.mrb[0].mxu0 %v464
    %v704 = vpop.f32.mrb[0].mxu0
    %v705 = vadd.f32 %v610, %v704
    %v706 = vpop.f32.mrb[0].mxu0
    %707 = vmatprep.mubr.f32.mxu0 0.0
    %708 = vmatmul.mubr.f32.gmra.mrb[0].mxu0 %v465
    %v709 = vpop.f32.mrb[0].mxu0
    %v710 = vadd.f32 %v615, %v709
    %v711 = vpop.f32.mrb[0].mxu0
    %712 = vdwg.mxu0
    %v713 = vmax.f32 %v685, 0.0
    %v714 = vmax.f32 %v690, 0.0
    %v715 = vmax.f32 %v695, 0.0
    %v716 = vmax.f32 %v700, 0.0
    %v717 = vmax.f32 %v705, 0.0
    %v718 = vmax.f32 %v710, 0.0
    %719 = vst [vmem:[%s3] sm:$0xff] %v713
    %720 = vst [vmem:[%s3 + $0x8] sm:$0xff] %v714
    %721 = vst [vmem:[%s3 + $0x10] sm:$0xf] %v715
    %s722 = scalar_lea.vmem %s3, 24
    %723 = vst [vmem:[%s722] sm:$0xff] %v716
    %724 = vst [vmem:[%s722 + $0x8] sm:$0xff] %v717
    %725 = vst [vmem:[%s722 + $0x10] sm:$0xf] %v718
    // Predicated region
    $region18: #{tpu_custom_call.1} parent=1 // pred_check
      _
    $region19: #{tpu_custom_call.1} parent=1 // pred_check_branch
      %727 = sbr.rel (0) target = $region21
    $region20: #{tpu_custom_call.1} parent=1 // pred_region
      _
    $region21: #{tpu_custom_call.1} parent=1 // pred_fallthru
      _
    // Predicated region
    $region22: #{tpu_custom_call.1} parent=1 // pred_check
      _
    $region23: #{tpu_custom_call.1} parent=1 // pred_check_branch
      %729 = sbr.rel (0) target = $region25
    $region24: #{tpu_custom_call.1} parent=1 // pred_region
      _
    $region25: #{tpu_custom_call.1} parent=1 // pred_fallthru
      _
    %730 = vsyncpa [#allocation5], 1

</llo_original>
